<compile_context>
chip_gen: v6e
topology: v6e:2x2x1
jax: 0.10.0
libtpu: 0.0.40
codegen_flags: <defaults>
</compile_context>

<pallas_src>
import functools
import math

import jax
import jax.numpy as jnp
import numpy as np
from jax import lax
from jax.experimental import pallas as pl
from jax.experimental.pallas import tpu as pltpu


_CHUNK_ROWS = 512                      # in-kernel chunk (rows -> lanes after transpose)
_TARGET_BLOCK_ROWS = 8192              # amortize the ~0.35us/grid-step overhead
_VMEM_TILE_BUDGET = 8 * 1024 * 1024    # in+out tiles, double-buffered, all generations


def _tensorcores_per_chip() -> int:
    """Best-effort TensorCore count per chip (perf-only; defaults to 1)."""
    try:
        info = pltpu.get_tpu_info()
        for attr in ("num_cores", "core_count", "tensorcore_count",
                     "num_tensorcores", "cores_per_chip"):
            v = getattr(info, attr, None)
            if isinstance(v, int) and v > 0:
                return v
    except Exception:
        pass
    try:
        kind = jax.devices()[0].device_kind.lower()
        if ("v7" in kind) or ("v4" in kind) or ("v5p" in kind):
            return 2
    except Exception:
        pass
    return 1


def _pick_blocks(rows: int, n: int, itemsize: int):
    """Returns (block_rows, chunk_rows, num_chunks)."""
    chunk = _CHUNK_ROWS
    if rows <= chunk:
        return rows, rows, 1
    # VMEM-aware cap: in + out tiles, double-buffered by the pipeline => ~4 resident tiles.
    max_rows = max(chunk, _VMEM_TILE_BUDGET // (4 * n * itemsize))
    br = min(_TARGET_BLOCK_ROWS, max_rows, rows)
    br = max(chunk, (br // chunk) * chunk)
    # Only force >=2 "parallel" grid steps when the chip actually has >1 TC (v7x);
    # on v5e/v6e splitting one block just adds per-step + DMA-startup overhead.
    if _tensorcores_per_chip() >= 2 and pl.cdiv(rows, br) < 2 and rows >= 2 * chunk:
        half = rows // 2
        br = max(chunk, (half // chunk) * chunk)
    num_chunks = br // chunk
    return br, chunk, num_chunks


def _normalize_lane_dense(x, *, eps: float, n: int):
    """x: (n, L) float32, one logical row per lane. Returns normalized (n, L)."""
    # counts[i, l] = #{ j : x[j, l] <= x[i, l] }   (1-based max-rank; exact on ties)
    counts = jnp.zeros_like(x)
    for j in range(n):                           # n small & static -> unrolled VPU ops
        counts = counts + (x[j:j + 1, :] <= x).astype(jnp.float32)

    cache = {}

    def order_stat(k):                           # k-th (0-indexed) smallest per lane
        if k not in cache:
            masked = jnp.where(counts >= float(k + 1), x, jnp.inf)
            cache[k] = jnp.min(masked, axis=0, keepdims=True)   # sublane reduce (XLU)
        return cache[k]

    def quantile(q):                             # torch 'linear' interpolation
        pos = q * (n - 1)
        lo = int(math.floor(pos))
        hi = min(lo + 1, n - 1)
        frac = pos - lo
        v_lo = order_stat(lo)
        if frac == 0.0:
            return v_lo
        return v_lo * (1.0 - frac) + order_stat(hi) * frac

    median = order_stat((n - 1) // 2)            # torch lower median
    iqr = jnp.maximum(quantile(0.75) - quantile(0.25) + eps, eps)
    inv = pl.reciprocal(iqr)                     # one reciprocal per row, not per element
    return (x - median) * inv


def _robust_norm_kernel(x_ref, o_ref, *, eps: float, n: int, chunk: int, num_chunks: int):
    out_dtype = o_ref.dtype

    def do_chunk(r0):
        xc = x_ref[pl.ds(r0, chunk), :]                 # (chunk, n) natural layout
        xt = jnp.transpose(xc.astype(jnp.float32))      # (n, chunk) lane-dense (XLU flip)
        yt = _normalize_lane_dense(xt, eps=eps, n=n)
        # Flip back before the store. Partial trailing grid blocks are safe because
        # every op above stays within a single lane (no cross-lane mixing of rows).
        o_ref[pl.ds(r0, chunk), :] = jnp.transpose(yt).astype(out_dtype)

    if num_chunks == 1:
        do_chunk(0)
    else:
        # Rolled loop bounds vreg live ranges to one chunk at a time.
        def body(c, carry):
            do_chunk(pl.multiple_of(c * chunk, chunk))
            return carry

        lax.fori_loop(0, num_chunks, body, 0)


def robust_normalization(x, eps: float = 1e-8, block_rows=None):
    """Pallas implementation of RobustNormalization(dim=-1, eps)."""
    orig_shape = x.shape
    n = int(orig_shape[-1])
    rows = int(np.prod(orig_shape[:-1]))

    x2 = x.reshape(rows, n)                      # contiguous flatten: free, no transpose

    itemsize = x2.dtype.itemsize
    if block_rows is None:
        br, chunk, num_chunks = _pick_blocks(rows, n, itemsize)
    else:
        chunk = min(_CHUNK_ROWS, block_rows)
        num_chunks = max(1, block_rows // chunk)
        br = chunk * num_chunks

    grid = (pl.cdiv(rows, br),)

    # Advisory cost estimate (rank counting dominates: ~3n VALU ops / element).
    cost = pl.CostEstimate(
        flops=rows * n * (3 * n + 16),
        transcendentals=0,
        bytes_accessed=2 * rows * n * itemsize,
    )

    cp_kwargs = dict(dimension_semantics=("parallel",))
    pipeline_bytes = 4 * br * n * itemsize       # in+out, double-buffered
    if pipeline_bytes > 12 * 1024 * 1024:
        # Large-n fallback: raise the scoped-VMEM limit (<=32 MiB is valid on
        # every generation, including v7x's 64 MiB physical VMEM).
        cp_kwargs["vmem_limit_bytes"] = min(32 * 1024 * 1024,
                                            pipeline_bytes + 4 * 1024 * 1024)

    out = pl.pallas_call(
        functools.partial(_robust_norm_kernel, eps=eps, n=n,
                          chunk=chunk, num_chunks=num_chunks),
        out_shape=jax.ShapeDtypeStruct((rows, n), x.dtype),
        grid_spec=pltpu.PrefetchScalarGridSpec(
            num_scalar_prefetch=0,
            grid=grid,
            in_specs=[pl.BlockSpec((br, n), lambda i: (i, 0))],
            out_specs=pl.BlockSpec((br, n), lambda i: (i, 0)),
        ),
        compiler_params=pltpu.CompilerParams(**cp_kwargs),
        cost_estimate=cost,
    )(x2)

    return out.reshape(orig_shape)


def robust_normalization_ref(x, eps: float = 1e-8):
    """Plain-JAX reference matching torch median/quantile semantics."""
    n = x.shape[-1]
    xs = jnp.sort(x, axis=-1)
    median = xs[..., (n - 1) // 2:(n - 1) // 2 + 1]

    def quant(q):
        pos = q * (n - 1)
        lo = int(math.floor(pos))
        hi = min(lo + 1, n - 1)
        frac = pos - lo
        return xs[..., lo:lo + 1] * (1.0 - frac) + xs[..., hi:hi + 1] * frac

    iqr = quant(0.75) - quant(0.25) + eps
    iqr = jnp.maximum(iqr, eps)
    return (x - median) / iqr


if __name__ == "__main__":
    key = jax.random.PRNGKey(0)

    # NCHW, small shape: batch=2, channels=4, spatial=16x16 (normalize along W=16).
    x = jax.random.normal(key, (2, 4, 16, 16), dtype=jnp.float32)
    out = jax.block_until_ready(robust_normalization(x))
    ref = robust_normalization_ref(x)
    np.testing.assert_allclose(np.asarray(out), np.asarray(ref), rtol=1e-5, atol=1e-5)

    # Larger row count to exercise the in-kernel chunked (fori_loop) path.
    k2 = jax.random.PRNGKey(0)
    x2 = jax.random.normal(k2, (2, 8, 96, 16), dtype=jnp.float32)
    out2 = jax.block_until_ready(robust_normalization(x2))
    ref2 = robust_normalization_ref(x2)
    np.testing.assert_allclose(np.asarray(out2), np.asarray(ref2), rtol=1e-5, atol=1e-5)

    print("KERNEL_OK")
</pallas_src>

<mosaic_0001>
module attributes {stable_mosaic.version = 11 : i64} {
  func.func @_robust_norm_kernel(%arg0: i32, %arg1: memref<128x16xf32, #tpu.memory_space<vmem>>, %arg2: memref<128x16xf32, #tpu.memory_space<vmem>>) attributes {dimension_semantics = [#tpu.dimension_semantics<parallel>], iteration_bounds = array<i64: 1>, scalar_prefetch = 0 : i64, scratch_operands = 0 : i64, tpu.core_type = #tpu.core_type<tc>, window_params = [{transform_indices = @transform_0, window_bounds = array<i64: 128, 16>}, {transform_indices = @transform_1, window_bounds = array<i64: 128, 16>}]} {
    %c0 = arith.constant 0 : index
    %c0_0 = arith.constant 0 : index
    %0 = vector.load %arg1[%c0, %c0_0] : memref<128x16xf32, #tpu.memory_space<vmem>>, vector<128x16xf32>
    %1 = tpu.transpose %0, [1, 0] : vector<128x16xf32> -> vector<16x128xf32>
    %cst = arith.constant 0.000000e+00 : f32
    %2 = vector.broadcast %cst : f32 to vector<16x128xf32>
    %3 = vector.extract_strided_slice %1 {offsets = [0, 0], sizes = [1, 128], strides = [1, 1]} : vector<16x128xf32> to vector<1x128xf32>
    %4 = vector.broadcast %3 : vector<1x128xf32> to vector<16x128xf32>
    %5 = arith.cmpf ole, %4, %1 : vector<16x128xf32>
    %6 = arith.extui %5 : vector<16x128xi1> to vector<16x128xi32>
    %7 = arith.sitofp %6 : vector<16x128xi32> to vector<16x128xf32>
    %8 = arith.addf %2, %7 : vector<16x128xf32>
    %9 = vector.extract_strided_slice %1 {offsets = [1, 0], sizes = [1, 128], strides = [1, 1]} : vector<16x128xf32> to vector<1x128xf32>
    %10 = vector.broadcast %9 : vector<1x128xf32> to vector<16x128xf32>
    %11 = arith.cmpf ole, %10, %1 : vector<16x128xf32>
    %12 = arith.extui %11 : vector<16x128xi1> to vector<16x128xi32>
    %13 = arith.sitofp %12 : vector<16x128xi32> to vector<16x128xf32>
    %14 = arith.addf %8, %13 : vector<16x128xf32>
    %15 = vector.extract_strided_slice %1 {offsets = [2, 0], sizes = [1, 128], strides = [1, 1]} : vector<16x128xf32> to vector<1x128xf32>
    %16 = vector.broadcast %15 : vector<1x128xf32> to vector<16x128xf32>
    %17 = arith.cmpf ole, %16, %1 : vector<16x128xf32>
    %18 = arith.extui %17 : vector<16x128xi1> to vector<16x128xi32>
    %19 = arith.sitofp %18 : vector<16x128xi32> to vector<16x128xf32>
    %20 = arith.addf %14, %19 : vector<16x128xf32>
    %21 = vector.extract_strided_slice %1 {offsets = [3, 0], sizes = [1, 128], strides = [1, 1]} : vector<16x128xf32> to vector<1x128xf32>
    %22 = vector.broadcast %21 : vector<1x128xf32> to vector<16x128xf32>
    %23 = arith.cmpf ole, %22, %1 : vector<16x128xf32>
    %24 = arith.extui %23 : vector<16x128xi1> to vector<16x128xi32>
    %25 = arith.sitofp %24 : vector<16x128xi32> to vector<16x128xf32>
    %26 = arith.addf %20, %25 : vector<16x128xf32>
    %27 = vector.extract_strided_slice %1 {offsets = [4, 0], sizes = [1, 128], strides = [1, 1]} : vector<16x128xf32> to vector<1x128xf32>
    %28 = vector.broadcast %27 : vector<1x128xf32> to vector<16x128xf32>
    %29 = arith.cmpf ole, %28, %1 : vector<16x128xf32>
    %30 = arith.extui %29 : vector<16x128xi1> to vector<16x128xi32>
    %31 = arith.sitofp %30 : vector<16x128xi32> to vector<16x128xf32>
    %32 = arith.addf %26, %31 : vector<16x128xf32>
    %33 = vector.extract_strided_slice %1 {offsets = [5, 0], sizes = [1, 128], strides = [1, 1]} : vector<16x128xf32> to vector<1x128xf32>
    %34 = vector.broadcast %33 : vector<1x128xf32> to vector<16x128xf32>
    %35 = arith.cmpf ole, %34, %1 : vector<16x128xf32>
    %36 = arith.extui %35 : vector<16x128xi1> to vector<16x128xi32>
    %37 = arith.sitofp %36 : vector<16x128xi32> to vector<16x128xf32>
    %38 = arith.addf %32, %37 : vector<16x128xf32>
    %39 = vector.extract_strided_slice %1 {offsets = [6, 0], sizes = [1, 128], strides = [1, 1]} : vector<16x128xf32> to vector<1x128xf32>
    %40 = vector.broadcast %39 : vector<1x128xf32> to vector<16x128xf32>
    %41 = arith.cmpf ole, %40, %1 : vector<16x128xf32>
    %42 = arith.extui %41 : vector<16x128xi1> to vector<16x128xi32>
    %43 = arith.sitofp %42 : vector<16x128xi32> to vector<16x128xf32>
    %44 = arith.addf %38, %43 : vector<16x128xf32>
    %45 = vector.extract_strided_slice %1 {offsets = [7, 0], sizes = [1, 128], strides = [1, 1]} : vector<16x128xf32> to vector<1x128xf32>
    %46 = vector.broadcast %45 : vector<1x128xf32> to vector<16x128xf32>
    %47 = arith.cmpf ole, %46, %1 : vector<16x128xf32>
    %48 = arith.extui %47 : vector<16x128xi1> to vector<16x128xi32>
    %49 = arith.sitofp %48 : vector<16x128xi32> to vector<16x128xf32>
    %50 = arith.addf %44, %49 : vector<16x128xf32>
    %51 = vector.extract_strided_slice %1 {offsets = [8, 0], sizes = [1, 128], strides = [1, 1]} : vector<16x128xf32> to vector<1x128xf32>
    %52 = vector.broadcast %51 : vector<1x128xf32> to vector<16x128xf32>
    %53 = arith.cmpf ole, %52, %1 : vector<16x128xf32>
    %54 = arith.extui %53 : vector<16x128xi1> to vector<16x128xi32>
    %55 = arith.sitofp %54 : vector<16x128xi32> to vector<16x128xf32>
    %56 = arith.addf %50, %55 : vector<16x128xf32>
    %57 = vector.extract_strided_slice %1 {offsets = [9, 0], sizes = [1, 128], strides = [1, 1]} : vector<16x128xf32> to vector<1x128xf32>
    %58 = vector.broadcast %57 : vector<1x128xf32> to vector<16x128xf32>
    %59 = arith.cmpf ole, %58, %1 : vector<16x128xf32>
    %60 = arith.extui %59 : vector<16x128xi1> to vector<16x128xi32>
    %61 = arith.sitofp %60 : vector<16x128xi32> to vector<16x128xf32>
    %62 = arith.addf %56, %61 : vector<16x128xf32>
    %63 = vector.extract_strided_slice %1 {offsets = [10, 0], sizes = [1, 128], strides = [1, 1]} : vector<16x128xf32> to vector<1x128xf32>
    %64 = vector.broadcast %63 : vector<1x128xf32> to vector<16x128xf32>
    %65 = arith.cmpf ole, %64, %1 : vector<16x128xf32>
    %66 = arith.extui %65 : vector<16x128xi1> to vector<16x128xi32>
    %67 = arith.sitofp %66 : vector<16x128xi32> to vector<16x128xf32>
    %68 = arith.addf %62, %67 : vector<16x128xf32>
    %69 = vector.extract_strided_slice %1 {offsets = [11, 0], sizes = [1, 128], strides = [1, 1]} : vector<16x128xf32> to vector<1x128xf32>
    %70 = vector.broadcast %69 : vector<1x128xf32> to vector<16x128xf32>
    %71 = arith.cmpf ole, %70, %1 : vector<16x128xf32>
    %72 = arith.extui %71 : vector<16x128xi1> to vector<16x128xi32>
    %73 = arith.sitofp %72 : vector<16x128xi32> to vector<16x128xf32>
    %74 = arith.addf %68, %73 : vector<16x128xf32>
    %75 = vector.extract_strided_slice %1 {offsets = [12, 0], sizes = [1, 128], strides = [1, 1]} : vector<16x128xf32> to vector<1x128xf32>
    %76 = vector.broadcast %75 : vector<1x128xf32> to vector<16x128xf32>
    %77 = arith.cmpf ole, %76, %1 : vector<16x128xf32>
    %78 = arith.extui %77 : vector<16x128xi1> to vector<16x128xi32>
    %79 = arith.sitofp %78 : vector<16x128xi32> to vector<16x128xf32>
    %80 = arith.addf %74, %79 : vector<16x128xf32>
    %81 = vector.extract_strided_slice %1 {offsets = [13, 0], sizes = [1, 128], strides = [1, 1]} : vector<16x128xf32> to vector<1x128xf32>
    %82 = vector.broadcast %81 : vector<1x128xf32> to vector<16x128xf32>
    %83 = arith.cmpf ole, %82, %1 : vector<16x128xf32>
    %84 = arith.extui %83 : vector<16x128xi1> to vector<16x128xi32>
    %85 = arith.sitofp %84 : vector<16x128xi32> to vector<16x128xf32>
    %86 = arith.addf %80, %85 : vector<16x128xf32>
    %87 = vector.extract_strided_slice %1 {offsets = [14, 0], sizes = [1, 128], strides = [1, 1]} : vector<16x128xf32> to vector<1x128xf32>
    %88 = vector.broadcast %87 : vector<1x128xf32> to vector<16x128xf32>
    %89 = arith.cmpf ole, %88, %1 : vector<16x128xf32>
    %90 = arith.extui %89 : vector<16x128xi1> to vector<16x128xi32>
    %91 = arith.sitofp %90 : vector<16x128xi32> to vector<16x128xf32>
    %92 = arith.addf %86, %91 : vector<16x128xf32>
    %93 = vector.extract_strided_slice %1 {offsets = [15, 0], sizes = [1, 128], strides = [1, 1]} : vector<16x128xf32> to vector<1x128xf32>
    %94 = vector.broadcast %93 : vector<1x128xf32> to vector<16x128xf32>
    %95 = arith.cmpf ole, %94, %1 : vector<16x128xf32>
    %96 = arith.extui %95 : vector<16x128xi1> to vector<16x128xi32>
    %97 = arith.sitofp %96 : vector<16x128xi32> to vector<16x128xf32>
    %98 = arith.addf %92, %97 : vector<16x128xf32>
    %cst_1 = arith.constant 8.000000e+00 : f32
    %99 = vector.broadcast %cst_1 : f32 to vector<16x128xf32>
    %100 = arith.cmpf oge, %98, %99 : vector<16x128xf32>
    %cst_2 = arith.constant 0x7F800000 : f32
    %101 = vector.broadcast %cst_2 : f32 to vector<16x128xf32>
    %102 = arith.select %100, %1, %101 : vector<16x128xi1>, vector<16x128xf32>
    %cst_3 = arith.constant dense<0x7F800000> : vector<128xf32>
    %103 = vector.multi_reduction <minimumf>, %102, %cst_3 [0] : vector<16x128xf32> to vector<128xf32>
    %104 = vector.shape_cast %103 : vector<128xf32> to vector<1x128xf32>
    %cst_4 = arith.constant 1.200000e+01 : f32
    %105 = vector.broadcast %cst_4 : f32 to vector<16x128xf32>
    %106 = arith.cmpf oge, %98, %105 : vector<16x128xf32>
    %cst_5 = arith.constant 0x7F800000 : f32
    %107 = vector.broadcast %cst_5 : f32 to vector<16x128xf32>
    %108 = arith.select %106, %1, %107 : vector<16x128xi1>, vector<16x128xf32>
    %cst_6 = arith.constant dense<0x7F800000> : vector<128xf32>
    %109 = vector.multi_reduction <minimumf>, %108, %cst_6 [0] : vector<16x128xf32> to vector<128xf32>
    %110 = vector.shape_cast %109 : vector<128xf32> to vector<1x128xf32>
    %cst_7 = arith.constant 7.500000e-01 : f32
    %111 = vector.broadcast %cst_7 : f32 to vector<1x128xf32>
    %112 = arith.mulf %110, %111 : vector<1x128xf32>
    %cst_8 = arith.constant 1.300000e+01 : f32
    %113 = vector.broadcast %cst_8 : f32 to vector<16x128xf32>
    %114 = arith.cmpf oge, %98, %113 : vector<16x128xf32>
    %cst_9 = arith.constant 0x7F800000 : f32
    %115 = vector.broadcast %cst_9 : f32 to vector<16x128xf32>
    %116 = arith.select %114, %1, %115 : vector<16x128xi1>, vector<16x128xf32>
    %cst_10 = arith.constant dense<0x7F800000> : vector<128xf32>
    %117 = vector.multi_reduction <minimumf>, %116, %cst_10 [0] : vector<16x128xf32> to vector<128xf32>
    %118 = vector.shape_cast %117 : vector<128xf32> to vector<1x128xf32>
    %cst_11 = arith.constant 2.500000e-01 : f32
    %119 = vector.broadcast %cst_11 : f32 to vector<1x128xf32>
    %120 = arith.mulf %118, %119 : vector<1x128xf32>
    %121 = arith.addf %112, %120 : vector<1x128xf32>
    %cst_12 = arith.constant 4.000000e+00 : f32
    %122 = vector.broadcast %cst_12 : f32 to vector<16x128xf32>
    %123 = arith.cmpf oge, %98, %122 : vector<16x128xf32>
    %cst_13 = arith.constant 0x7F800000 : f32
    %124 = vector.broadcast %cst_13 : f32 to vector<16x128xf32>
    %125 = arith.select %123, %1, %124 : vector<16x128xi1>, vector<16x128xf32>
    %cst_14 = arith.constant dense<0x7F800000> : vector<128xf32>
    %126 = vector.multi_reduction <minimumf>, %125, %cst_14 [0] : vector<16x128xf32> to vector<128xf32>
    %127 = vector.shape_cast %126 : vector<128xf32> to vector<1x128xf32>
    %cst_15 = arith.constant 2.500000e-01 : f32
    %128 = vector.broadcast %cst_15 : f32 to vector<1x128xf32>
    %129 = arith.mulf %127, %128 : vector<1x128xf32>
    %cst_16 = arith.constant 5.000000e+00 : f32
    %130 = vector.broadcast %cst_16 : f32 to vector<16x128xf32>
    %131 = arith.cmpf oge, %98, %130 : vector<16x128xf32>
    %cst_17 = arith.constant 0x7F800000 : f32
    %132 = vector.broadcast %cst_17 : f32 to vector<16x128xf32>
    %133 = arith.select %131, %1, %132 : vector<16x128xi1>, vector<16x128xf32>
    %cst_18 = arith.constant dense<0x7F800000> : vector<128xf32>
    %134 = vector.multi_reduction <minimumf>, %133, %cst_18 [0] : vector<16x128xf32> to vector<128xf32>
    %135 = vector.shape_cast %134 : vector<128xf32> to vector<1x128xf32>
    %cst_19 = arith.constant 7.500000e-01 : f32
    %136 = vector.broadcast %cst_19 : f32 to vector<1x128xf32>
    %137 = arith.mulf %135, %136 : vector<1x128xf32>
    %138 = arith.addf %129, %137 : vector<1x128xf32>
    %139 = arith.subf %121, %138 : vector<1x128xf32>
    %cst_20 = arith.constant 9.99999993E-9 : f32
    %140 = vector.broadcast %cst_20 : f32 to vector<1x128xf32>
    %141 = arith.addf %139, %140 : vector<1x128xf32>
    %cst_21 = arith.constant 9.99999993E-9 : f32
    %142 = vector.broadcast %cst_21 : f32 to vector<1x128xf32>
    %143 = arith.maximumf %141, %142 : vector<1x128xf32>
    %144 = tpu.reciprocal %143 : vector<1x128xf32> -> vector<1x128xf32>
    %145 = vector.broadcast %104 : vector<1x128xf32> to vector<16x128xf32>
    %146 = arith.subf %1, %145 : vector<16x128xf32>
    %147 = vector.broadcast %144 : vector<1x128xf32> to vector<16x128xf32>
    %148 = arith.mulf %146, %147 : vector<16x128xf32>
    %149 = tpu.transpose %148, [1, 0] : vector<16x128xf32> -> vector<128x16xf32>
    %c0_22 = arith.constant 0 : index
    %c0_23 = arith.constant 0 : index
    %150 = vector.load %arg2[%c0_22, %c0_23] : memref<128x16xf32, #tpu.memory_space<vmem>>, vector<128x16xf32>
    tpu.vector_store %arg2[%c0_22, %c0_23], %149 {strides = array<i32>} : memref<128x16xf32, #tpu.memory_space<vmem>>, vector<128x16xf32>,
    return
  }
  func.func @transform_0(%arg0: i32) -> (i32, i32) {
    %c0_i32 = arith.constant 0 : i32
    %c0_i32_0 = arith.constant 0 : i32
    return %arg0, %c0_i32 : i32, i32
  }
  func.func @transform_1(%arg0: i32) -> (i32, i32) {
    %c0_i32 = arith.constant 0 : i32
    %c0_i32_0 = arith.constant 0 : i32
    return %arg0, %c0_i32 : i32, i32
  }
}

</mosaic_0001>

<llo_original>
// kernel: tpu_custom_call.1
$region0: #{tpu_custom_call.1}
  #allocation0 [shape = 'u32[]', space=smem, size = 0x4, offset = 0x4, fixed_abs, tag = 'smem constant byte address 0x4 - core index']
  #allocation1 [shape = 'u32[144,128]{1,0:T(1,128)}', space=vmem, size = 0x12000, scoped, tag = 'internal scratch']
  %s0 = inlined_call_operand.vmem [shape: f32[128,16], index: 0, kind: input, shape index: {}]
  %s1 = inlined_call_operand.vmem [shape: f32[128,16], index: 1, kind: output, shape index: {}]
  %s2 = sld [smem:[#allocation0]]
  $region14: #{tpu_custom_call.1} parent=0
    _
  %s4 = ssub.s32 1, %s2
  %s5 = scalar_select 0, %s4, %s2
  // Predicated region
  $region2: #{tpu_custom_call.1} parent=0 // pred_check
    _
  $region3: #{tpu_custom_call.1} parent=0 // pred_check_branch
    %7 = sbr.rel (0) target = $region5
  $region4: #{tpu_custom_call.1} parent=0 // pred_region
    _
  $region5: #{tpu_custom_call.1} parent=0 // pred_fallthru
    _
  %v8 = vld [vmem:[%s0] sm:$0xff]
  %v9 = vld [vmem:[%s0 + $0x8] sm:$0xff]
  %v10 = vld [vmem:[%s0 + $0x10] sm:$0xff]
  %v11 = vld [vmem:[%s0 + $0x18] sm:$0xff]
  %v12 = vld [vmem:[%s0 + $0x20] sm:$0xff]
  %v13 = vld [vmem:[%s0 + $0x28] sm:$0xff]
  %v14 = vld [vmem:[%s0 + $0x30] sm:$0xff]
  %v15 = vld [vmem:[%s0 + $0x38] sm:$0xff]
  %v16 = vld [vmem:[%s0 + $0x40] sm:$0xff]
  %v17 = vld [vmem:[%s0 + $0x48] sm:$0xff]
  %v18 = vld [vmem:[%s0 + $0x50] sm:$0xff]
  %v19 = vld [vmem:[%s0 + $0x58] sm:$0xff]
  %v20 = vld [vmem:[%s0 + $0x60] sm:$0xff]
  %v21 = vld [vmem:[%s0 + $0x68] sm:$0xff]
  %v22 = vld [vmem:[%s0 + $0x70] sm:$0xff]
  %v23 = vld [vmem:[%s0 + $0x78] sm:$0xff]
  %24 = vxpose.xlu0.b32.start [1/16] %v8, 128
  %25 = vxpose.xlu0.b32.cont [2/16] %v9, 128
  %26 = vxpose.xlu0.b32.cont [3/16] %v10, 128
  %27 = vxpose.xlu0.b32.cont [4/16] %v11, 128
  %28 = vxpose.xlu0.b32.cont [5/16] %v12, 128
  %29 = vxpose.xlu0.b32.cont [6/16] %v13, 128
  %30 = vxpose.xlu0.b32.cont [7/16] %v14, 128
  %31 = vxpose.xlu0.b32.cont [8/16] %v15, 128
  %32 = vxpose.xlu0.b32.cont [9/16] %v16, 128
  %33 = vxpose.xlu0.b32.cont [10/16] %v17, 128
  %34 = vxpose.xlu0.b32.cont [11/16] %v18, 128
  %35 = vxpose.xlu0.b32.cont [12/16] %v19, 128
  %36 = vxpose.xlu0.b32.cont [13/16] %v20, 128
  %37 = vxpose.xlu0.b32.cont [14/16] %v21, 128
  %38 = vxpose.xlu0.b32.cont [15/16] %v22, 128
  %39 = vxpose.xlu0.b32.end [16/16] %v23, 128
  %v40 = vpop.trf.xlu0
  %v41 = vpop.trf.xlu0
  %v42 = vpop.trf.xlu0
  %v43 = vpop.trf.xlu0
  %v44 = vpop.trf.xlu0
  %v45 = vpop.trf.xlu0
  %v46 = vpop.trf.xlu0
  %v47 = vpop.trf.xlu0
  %v48 = vpop.trf.xlu0
  %v49 = vpop.trf.xlu0
  %v50 = vpop.trf.xlu0
  %v51 = vpop.trf.xlu0
  %v52 = vpop.trf.xlu0
  %v53 = vpop.trf.xlu0
  %v54 = vpop.trf.xlu0
  %v55 = vpop.trf.xlu0
  %v56 = vlaneseq
  %v57 = vshrl.u32 %v56, 7
  %v58 = vsub.s32 0, %v57
  %v59 = vrot.slane %v40, %v58
  %vm60 = vcmp.le.f32.partialorder %v59, %v40
  %vm61 = vcmp.le.f32.partialorder %v59, %v41
  %v62 = vsel %vm60, 1, 0
  %v63 = vsel %vm61, 1, 0
  %v64 = vcvt.s32.f32 %v62
  %v65 = vcvt.s32.f32 %v63
  %v66 = vadd.f32 %v64, 0.0
  %v67 = vadd.f32 %v65, 0.0
  %v68 = vlaneseq
  %v69 = vshrl.u32 %v68, 7
  %v70 = vsub.s32 1, %v69
  %v71 = vrot.slane %v40, %v70
  %vm72 = vcmp.le.f32.partialorder %v71, %v40
  %vm73 = vcmp.le.f32.partialorder %v71, %v41
  %v74 = vsel %vm72, 1, 0
  %v75 = vsel %vm73, 1, 0
  %v76 = vcvt.s32.f32 %v74
  %v77 = vcvt.s32.f32 %v75
  %v78 = vadd.f32 %v66, %v76
  %v79 = vadd.f32 %v67, %v77
  %v80 = vlaneseq
  %v81 = vshrl.u32 %v80, 7
  %v82 = vsub.s32 2, %v81
  %v83 = vrot.slane %v40, %v82
  %vm84 = vcmp.le.f32.partialorder %v83, %v40
  %vm85 = vcmp.le.f32.partialorder %v83, %v41
  %v86 = vsel %vm84, 1, 0
  %v87 = vsel %vm85, 1, 0
  %v88 = vcvt.s32.f32 %v86
  %v89 = vcvt.s32.f32 %v87
  %v90 = vadd.f32 %v78, %v88
  %v91 = vadd.f32 %v79, %v89
  %v92 = vlaneseq
  %v93 = vshrl.u32 %v92, 7
  %v94 = vsub.s32 3, %v93
  %v95 = vrot.slane %v40, %v94
  %vm96 = vcmp.le.f32.partialorder %v95, %v40
  %vm97 = vcmp.le.f32.partialorder %v95, %v41
  %v98 = vsel %vm96, 1, 0
  %v99 = vsel %vm97, 1, 0
  %v100 = vcvt.s32.f32 %v98
  %v101 = vcvt.s32.f32 %v99
  %v102 = vadd.f32 %v90, %v100
  %v103 = vadd.f32 %v91, %v101
  %v104 = vlaneseq
  %v105 = vshrl.u32 %v104, 7
  %v106 = vsub.s32 4, %v105
  %v107 = vrot.slane %v40, %v106
  %vm108 = vcmp.le.f32.partialorder %v107, %v40
  %vm109 = vcmp.le.f32.partialorder %v107, %v41
  %v110 = vsel %vm108, 1, 0
  %v111 = vsel %vm109, 1, 0
  %v112 = vcvt.s32.f32 %v110
  %v113 = vcvt.s32.f32 %v111
  %v114 = vadd.f32 %v102, %v112
  %v115 = vadd.f32 %v103, %v113
  %v116 = vlaneseq
  %v117 = vshrl.u32 %v116, 7
  %v118 = vsub.s32 5, %v117
  %v119 = vrot.slane %v40, %v118
  %vm120 = vcmp.le.f32.partialorder %v119, %v40
  %vm121 = vcmp.le.f32.partialorder %v119, %v41
  %v122 = vsel %vm120, 1, 0
  %v123 = vsel %vm121, 1, 0
  %v124 = vcvt.s32.f32 %v122
  %v125 = vcvt.s32.f32 %v123
  %v126 = vadd.f32 %v114, %v124
  %v127 = vadd.f32 %v115, %v125
  %v128 = vlaneseq
  %v129 = vshrl.u32 %v128, 7
  %v130 = vsub.s32 6, %v129
  %v131 = vrot.slane %v40, %v130
  %vm132 = vcmp.le.f32.partialorder %v131, %v40
  %vm133 = vcmp.le.f32.partialorder %v131, %v41
  %v134 = vsel %vm132, 1, 0
  %v135 = vsel %vm133, 1, 0
  %v136 = vcvt.s32.f32 %v134
  %v137 = vcvt.s32.f32 %v135
  %v138 = vadd.f32 %v126, %v136
  %v139 = vadd.f32 %v127, %v137
  %v140 = vlaneseq
  %v141 = vshrl.u32 %v140, 7
  %v142 = vsub.s32 7, %v141
  %v143 = vrot.slane %v40, %v142
  %vm144 = vcmp.le.f32.partialorder %v143, %v40
  %vm145 = vcmp.le.f32.partialorder %v143, %v41
  %v146 = vsel %vm144, 1, 0
  %v147 = vsel %vm145, 1, 0
  %v148 = vcvt.s32.f32 %v146
  %v149 = vcvt.s32.f32 %v147
  %v150 = vadd.f32 %v138, %v148
  %v151 = vadd.f32 %v139, %v149
  %v152 = vlaneseq
  %v153 = vshrl.u32 %v152, 7
  %v154 = vsub.s32 0, %v153
  %v155 = vrot.slane %v41, %v154
  %vm156 = vcmp.le.f32.partialorder %v155, %v40
  %vm157 = vcmp.le.f32.partialorder %v155, %v41
  %v158 = vsel %vm156, 1, 0
  %v159 = vsel %vm157, 1, 0
  %v160 = vcvt.s32.f32 %v158
  %v161 = vcvt.s32.f32 %v159
  %v162 = vadd.f32 %v150, %v160
  %v163 = vadd.f32 %v151, %v161
  %v164 = vlaneseq
  %v165 = vshrl.u32 %v164, 7
  %v166 = vsub.s32 1, %v165
  %v167 = vrot.slane %v41, %v166
  %vm168 = vcmp.le.f32.partialorder %v167, %v40
  %vm169 = vcmp.le.f32.partialorder %v167, %v41
  %v170 = vsel %vm168, 1, 0
  %v171 = vsel %vm169, 1, 0
  %v172 = vcvt.s32.f32 %v170
  %v173 = vcvt.s32.f32 %v171
  %v174 = vadd.f32 %v162, %v172
  %v175 = vadd.f32 %v163, %v173
  %v176 = vlaneseq
  %v177 = vshrl.u32 %v176, 7
  %v178 = vsub.s32 2, %v177
  %v179 = vrot.slane %v41, %v178
  %vm180 = vcmp.le.f32.partialorder %v179, %v40
  %vm181 = vcmp.le.f32.partialorder %v179, %v41
  %v182 = vsel %vm180, 1, 0
  %v183 = vsel %vm181, 1, 0
  %v184 = vcvt.s32.f32 %v182
  %v185 = vcvt.s32.f32 %v183
  %v186 = vadd.f32 %v174, %v184
  %v187 = vadd.f32 %v175, %v185
  %v188 = vlaneseq
  %v189 = vshrl.u32 %v188, 7
  %v190 = vsub.s32 3, %v189
  %v191 = vrot.slane %v41, %v190
  %vm192 = vcmp.le.f32.partialorder %v191, %v40
  %vm193 = vcmp.le.f32.partialorder %v191, %v41
  %v194 = vsel %vm192, 1, 0
  %v195 = vsel %vm193, 1, 0
  %v196 = vcvt.s32.f32 %v194
  %v197 = vcvt.s32.f32 %v195
  %v198 = vadd.f32 %v186, %v196
  %v199 = vadd.f32 %v187, %v197
  %v200 = vlaneseq
  %v201 = vshrl.u32 %v200, 7
  %v202 = vsub.s32 4, %v201
  %v203 = vrot.slane %v41, %v202
  %vm204 = vcmp.le.f32.partialorder %v203, %v40
  %vm205 = vcmp.le.f32.partialorder %v203, %v41
  %v206 = vsel %vm204, 1, 0
  %v207 = vsel %vm205, 1, 0
  %v208 = vcvt.s32.f32 %v206
  %v209 = vcvt.s32.f32 %v207
  %v210 = vadd.f32 %v198, %v208
  %v211 = vadd.f32 %v199, %v209
  %v212 = vlaneseq
  %v213 = vshrl.u32 %v212, 7
  %v214 = vsub.s32 5, %v213
  %v215 = vrot.slane %v41, %v214
  %vm216 = vcmp.le.f32.partialorder %v215, %v40
  %vm217 = vcmp.le.f32.partialorder %v215, %v41
  %v218 = vsel %vm216, 1, 0
  %v219 = vsel %vm217, 1, 0
  %v220 = vcvt.s32.f32 %v218
  %v221 = vcvt.s32.f32 %v219
  %v222 = vadd.f32 %v210, %v220
  %v223 = vadd.f32 %v211, %v221
  %v224 = vlaneseq
  %v225 = vshrl.u32 %v224, 7
  %v226 = vsub.s32 6, %v225
  %v227 = vrot.slane %v41, %v226
  %vm228 = vcmp.le.f32.partialorder %v227, %v40
  %vm229 = vcmp.le.f32.partialorder %v227, %v41
  %v230 = vsel %vm228, 1, 0
  %v231 = vsel %vm229, 1, 0
  %v232 = vcvt.s32.f32 %v230
  %v233 = vcvt.s32.f32 %v231
  %v234 = vadd.f32 %v222, %v232
  %v235 = vadd.f32 %v223, %v233
  %v236 = vlaneseq
  %v237 = vshrl.u32 %v236, 7
  %v238 = vsub.s32 7, %v237
  %v239 = vrot.slane %v41, %v238
  %vm240 = vcmp.le.f32.partialorder %v239, %v40
  %vm241 = vcmp.le.f32.partialorder %v239, %v41
  %v242 = vsel %vm240, 1, 0
  %v243 = vsel %vm241, 1, 0
  %v244 = vcvt.s32.f32 %v242
  %v245 = vcvt.s32.f32 %v243
  %v246 = vadd.f32 %v234, %v244
  %v247 = vadd.f32 %v235, %v245
  %vm248 = vcmp.ge.f32.partialorder %v246, 8.0
  %vm249 = vcmp.ge.f32.partialorder %v247, 8.0
  %v250 = vsel %vm248, %v40, inf
  %v251 = vsel %vm249, %v41, inf
  %v252 = vmin.f32 %v250, %v251
  %v253 = vrot.slane %v252, 4
  %v254 = vmin.f32 %v252, %v253
  %v255 = vrot.slane %v254, 2
  %v256 = vmin.f32 %v254, %v255
  %v257 = vrot.slane %v256, 1
  %v258 = vmin.f32 %v256, %v257
  %vm259 = vcmp.ge.f32.partialorder %v246, 12.0
  %vm260 = vcmp.ge.f32.partialorder %v247, 12.0
  %v261 = vsel %vm259, %v40, inf
  %v262 = vsel %vm260, %v41, inf
  %v263 = vmin.f32 %v261, %v262
  %v264 = vrot.slane %v263, 4
  %v265 = vmin.f32 %v263, %v264
  %v266 = vrot.slane %v265, 2
  %v267 = vmin.f32 %v265, %v266
  %v268 = vrot.slane %v267, 1
  %v269 = vmin.f32 %v267, %v268
  %v270 = vmul.f32 %v269, 0.75
  %vm271 = vcmp.ge.f32.partialorder %v246, 13.0
  %vm272 = vcmp.ge.f32.partialorder %v247, 13.0
  %v273 = vsel %vm271, %v40, inf
  %v274 = vsel %vm272, %v41, inf
  %v275 = vmin.f32 %v273, %v274
  %v276 = vrot.slane %v275, 4
  %v277 = vmin.f32 %v275, %v276
  %v278 = vrot.slane %v277, 2
  %v279 = vmin.f32 %v277, %v278
  %v280 = vrot.slane %v279, 1
  %v281 = vmin.f32 %v279, %v280
  %v282 = vmul.f32 %v281, 0.25
  %v283 = vadd.f32 %v270, %v282
  %vm284 = vcmp.ge.f32.partialorder %v246, 4.0
  %vm285 = vcmp.ge.f32.partialorder %v247, 4.0
  %v286 = vsel %vm284, %v40, inf
  %v287 = vsel %vm285, %v41, inf
  %v288 = vmin.f32 %v286, %v287
  %v289 = vrot.slane %v288, 4
  %v290 = vmin.f32 %v288, %v289
  %v291 = vrot.slane %v290, 2
  %v292 = vmin.f32 %v290, %v291
  %v293 = vrot.slane %v292, 1
  %v294 = vmin.f32 %v292, %v293
  %v295 = vmul.f32 %v294, 0.25
  %vm296 = vcmp.ge.f32.partialorder %v246, 5.0
  %vm297 = vcmp.ge.f32.partialorder %v247, 5.0
  %v298 = vsel %vm296, %v40, inf
  %v299 = vsel %vm297, %v41, inf
  %v300 = vmin.f32 %v298, %v299
  %v301 = vrot.slane %v300, 4
  %v302 = vmin.f32 %v300, %v301
  %v303 = vrot.slane %v302, 2
  %v304 = vmin.f32 %v302, %v303
  %v305 = vrot.slane %v304, 1
  %v306 = vmin.f32 %v304, %v305
  %v307 = vmul.f32 %v306, 0.75
  %v308 = vadd.f32 %v295, %v307
  %v309 = vsub.f32 %v283, %v308
  %v310 = vadd.f32 %v309, 1e-08
  %v311 = vmax.f32 %v310, 1e-08
  %v312 = vrcp.pop %v311
  %v313 = vsub.f32 %v40, %v258
  %v314 = vsub.f32 %v41, %v258
  %v315 = vmul.f32 %v313, %v312
  %v316 = vmul.f32 %v314, %v312
  %317 = vxpose.xlu0.b32.start [1/16] %v315, 128
  %318 = vxpose.xlu0.b32.cont [2/16] %v316, 128
  %319 = vxpose.xlu0.b32.cont [3/16] 0.0, 128
  %320 = vxpose.xlu0.b32.cont [4/16] 0.0, 128
  %321 = vxpose.xlu0.b32.cont [5/16] 0.0, 128
  %322 = vxpose.xlu0.b32.cont [6/16] 0.0, 128
  %323 = vxpose.xlu0.b32.cont [7/16] 0.0, 128
  %324 = vxpose.xlu0.b32.cont [8/16] 0.0, 128
  %325 = vxpose.xlu0.b32.cont [9/16] 0.0, 128
  %326 = vxpose.xlu0.b32.cont [10/16] 0.0, 128
  %327 = vxpose.xlu0.b32.cont [11/16] 0.0, 128
  %328 = vxpose.xlu0.b32.cont [12/16] 0.0, 128
  %329 = vxpose.xlu0.b32.cont [13/16] 0.0, 128
  %330 = vxpose.xlu0.b32.cont [14/16] 0.0, 128
  %331 = vxpose.xlu0.b32.cont [15/16] 0.0, 128
  %332 = vxpose.xlu0.b32.end [16/16] 0.0, 128
  %v333 = vpop.trf.xlu0
  %v334 = vpop.trf.xlu0
  %v335 = vpop.trf.xlu0
  %v336 = vpop.trf.xlu0
  %v337 = vpop.trf.xlu0
  %v338 = vpop.trf.xlu0
  %v339 = vpop.trf.xlu0
  %v340 = vpop.trf.xlu0
  %v341 = vpop.trf.xlu0
  %v342 = vpop.trf.xlu0
  %v343 = vpop.trf.xlu0
  %v344 = vpop.trf.xlu0
  %v345 = vpop.trf.xlu0
  %v346 = vpop.trf.xlu0
  %v347 = vpop.trf.xlu0
  %v348 = vpop.trf.xlu0
  %vm349 = vcmask 130048
  %350 = vst.msk [vmem:[%s1] sm:$0xff] %vm349, %v333
  %351 = vst.msk [vmem:[%s1 + $0x8] sm:$0xff] %vm349, %v334
  %352 = vst.msk [vmem:[%s1 + $0x10] sm:$0xff] %vm349, %v335
  %353 = vst.msk [vmem:[%s1 + $0x18] sm:$0xff] %vm349, %v336
  %354 = vst.msk [vmem:[%s1 + $0x20] sm:$0xff] %vm349, %v337
  %355 = vst.msk [vmem:[%s1 + $0x28] sm:$0xff] %vm349, %v338
  %356 = vst.msk [vmem:[%s1 + $0x30] sm:$0xff] %vm349, %v339
  %357 = vst.msk [vmem:[%s1 + $0x38] sm:$0xff] %vm349, %v340
  %358 = vst.msk [vmem:[%s1 + $0x40] sm:$0xff] %vm349, %v341
  %359 = vst.msk [vmem:[%s1 + $0x48] sm:$0xff] %vm349, %v342
  %360 = vst.msk [vmem:[%s1 + $0x50] sm:$0xff] %vm349, %v343
  %361 = vst.msk [vmem:[%s1 + $0x58] sm:$0xff] %vm349, %v344
  %362 = vst.msk [vmem:[%s1 + $0x60] sm:$0xff] %vm349, %v345
  %363 = vst.msk [vmem:[%s1 + $0x68] sm:$0xff] %vm349, %v346
  %364 = vst.msk [vmem:[%s1 + $0x70] sm:$0xff] %vm349, %v347
  %365 = vst.msk [vmem:[%s1 + $0x78] sm:$0xff] %vm349, %v348
  // Predicated region
  $region6: #{tpu_custom_call.1} parent=0 // pred_check
    _
  $region7: #{tpu_custom_call.1} parent=0 // pred_check_branch
    %367 = sbr.rel (0) target = $region9
  $region8: #{tpu_custom_call.1} parent=0 // pred_region
    _
  $region9: #{tpu_custom_call.1} parent=0 // pred_fallthru
    _
  // Predicated region
  $region10: #{tpu_custom_call.1} parent=0 // pred_check
    _
  $region11: #{tpu_custom_call.1} parent=0 // pred_check_branch
    %369 = sbr.rel (0) target = $region13
  $region12: #{tpu_custom_call.1} parent=0 // pred_region
    _
  $region13: #{tpu_custom_call.1} parent=0 // pred_fallthru
    _

</llo_original>
